<compile_context>
chip_gen: v5e
topology: v5e:2x2
jax: 0.10.0
libtpu: 0.0.40
codegen_flags: <defaults>
</compile_context>

<pallas_src>
import jax
import jax.numpy as jnp
from jax import lax
from jax.experimental import pallas as pl
from jax.experimental.pallas import tpu as pltpu

# ---- config (mirrors GPTConfig, at small test scale) -----------------------
N_EMB = 32          # config.n_emb = 4 * 8
N_HEAD = 4          # config.n_head
HEAD_SIZE = N_EMB // N_HEAD
LN_EPS = 1e-5
MASK_NEG = -1e30    # finite "minus infinity" for the additive causal bias


def _layer_norm(x, gamma, beta):
    mu = jnp.mean(x, axis=-1, keepdims=True)
    var = jnp.mean((x - mu) ** 2, axis=-1, keepdims=True)
    return (x - mu) * lax.rsqrt(var + LN_EPS) * gamma + beta


def block_kernel(x_ref, vec_ref, mask_ref, wqkv_ref, wproj_ref,
                 w1_ref, w2_ref, o_ref):
    """One grid step: full GPT Block forward on Bt batch elements at once."""
    Bt, T, E = x_ref.shape
    N = Bt * T
    H = N_HEAD
    hs = E // H

    # --- packed bias / LayerNorm vectors (single small DMA) -----------------
    ln1_g = vec_ref[0:1, :E]
    ln1_b = vec_ref[1:2, :E]
    ln2_g = vec_ref[2:3, :E]
    ln2_b = vec_ref[3:4, :E]
    b_qkv = vec_ref[4:5, :3 * E]
    b_proj = vec_ref[5:6, :E]
    b1 = vec_ref[6:7, :]          # (1, 4E)
    b2 = vec_ref[7:8, :E]

    # Fold (Bt, T) -> rows for the row matmuls (leading-dim merge only).
    x = x_ref[...].reshape(N, E)

    # ---------------- LayerNorm 1 (f32) ----------------
    x1 = _layer_norm(x, ln1_g, ln1_b)

    # ---------------- Multi-head causal self-attention ----------------
    # Fused flat QKV projection: one (N,E)@(E,3E) bf16 MXU matmul, f32 accum.
    qkv = jnp.dot(x1.astype(jnp.bfloat16), wqkv_ref[...],
                  preferred_element_type=jnp.float32) + b_qkv
    # Attention scale is n_emb**-0.5 (matches the PyTorch Head), folded into q.
    q = qkv[:, :E] * (E ** -0.5)
    k = qkv[:, E:2 * E]
    v = qkv[:, 2 * E:3 * E]
    # Leading-dim split back to (Bt, T, E) so attention stays per-batch.
    q3 = q.reshape(Bt, T, E)
    k3 = k.reshape(Bt, T, E)
    v3 = v.reshape(Bt, T, E)

    mask_bias = mask_ref[...]     # (T, T) additive causal bias, precomputed

    # Per-head attention (H=4, statically unrolled).  Scores/softmax/PV are
    # Bt-batched einsums of shape (Bt, T, T) — no folded-batch blowup.
    head_outs = []
    for h in range(H):
        sl = slice(h * hs, (h + 1) * hs)
        s = jnp.einsum("bqd,bkd->bqk",
                       q3[..., sl].astype(jnp.bfloat16),
                       k3[..., sl].astype(jnp.bfloat16),
                       preferred_element_type=jnp.float32) + mask_bias
        m = jnp.max(s, axis=-1, keepdims=True)
        e = jnp.exp(s - m)
        p = e / jnp.sum(e, axis=-1, keepdims=True)   # exact division (f32)
        # attention dropout: identity (eval mode)
        head_outs.append(
            jnp.einsum("bqk,bkd->bqd",
                       p.astype(jnp.bfloat16),
                       v3[..., sl].astype(jnp.bfloat16),
                       preferred_element_type=jnp.float32))

    # concat(heads) -> (Bt, T, E) -> (N, E); single K=E output projection.
    att = jnp.concatenate(head_outs, axis=-1).reshape(N, E)
    att = jnp.dot(att.astype(jnp.bfloat16), wproj_ref[...],
                  preferred_element_type=jnp.float32) + b_proj
    # proj dropout: identity (eval mode)

    xr = x + att                        # residual 1 (f32)

    # ---------------- LayerNorm 2 + FeedForward ----------------
    x2 = _layer_norm(xr, ln2_g, ln2_b)
    h1 = jnp.dot(x2.astype(jnp.bfloat16), w1_ref[...],
                 preferred_element_type=jnp.float32) + b1
    h1 = jnp.maximum(h1, 0.0)           # ReLU (f32)
    ff = jnp.dot(h1.astype(jnp.bfloat16), w2_ref[...],
                 preferred_element_type=jnp.float32) + b2
    # ffn dropout: identity (eval mode)

    o_ref[...] = (xr + ff).reshape(Bt, T, E)     # residual 2


def pack_params(p):
    """Repack canonical f32 params into kernel layouts (bf16 weights)."""
    E = p["wq"].shape[0]

    # Flat QKV weight (E, 3E): columns [0:E]=Q, [E:2E]=K, [2E:3E]=V, with the
    # per-head column order identical to the reference slicing.
    w_qkv = jnp.concatenate([p["wq"], p["wk"], p["wv"]],
                            axis=1).astype(jnp.bfloat16)             # (E, 3E)
    b_qkv = jnp.concatenate([p["bq"], p["bk"], p["bv"]], axis=1)[0]  # (3E,)

    vec = jnp.zeros((8, 4 * E), jnp.float32)                         # packed
    vec = vec.at[0, :E].set(p["ln1_g"][0]).at[1, :E].set(p["ln1_b"][0])
    vec = vec.at[2, :E].set(p["ln2_g"][0]).at[3, :E].set(p["ln2_b"][0])
    vec = vec.at[4, :3 * E].set(b_qkv)
    vec = vec.at[5, :E].set(p["bproj"][0])
    vec = vec.at[6, :].set(p["b1"][0])
    vec = vec.at[7, :E].set(p["b2"][0])

    return dict(vec=vec,
                w_qkv=w_qkv,
                w_proj=p["wproj"].astype(jnp.bfloat16),              # (E, E)
                w1=p["w1"].astype(jnp.bfloat16),                     # (E, 4E)
                w2=p["w2"].astype(jnp.bfloat16))                     # (4E, E)


def block_forward(x, params, block_batch=None):
    """x: (B, T, E) float32. params: dict of canonical f32 weights."""
    B, T, E = x.shape
    H4 = 4 * E
    kp = pack_params(params)

    # (T, T) additive causal bias, computed once on the host.
    mask_bias = jnp.where(jnp.tril(jnp.ones((T, T), bool)),
                          0.0, MASK_NEG).astype(jnp.float32)

    if block_batch is None:
        # Target ~256 rows per grid step (fills v6e/v7x 256-wide MXU rows), but
        # keep at least 2 grid steps when B >= 2 so the "parallel" axis can be
        # sharded across v7x's two TensorCores / megacore.
        block_batch = min(B, max(1, 256 // T))
        if B >= 2:
            block_batch = min(block_batch, B // 2)
        block_batch = max(block_batch, 1)
        while B % block_batch:
            block_batch -= 1
    Bt = block_batch
    G = B // Bt

    def rep(shape):                      # replicated (non-tiled) operand
        zeros = (0,) * len(shape)
        return pl.BlockSpec(shape, lambda b, z=zeros: z)

    in_specs = [
        pl.BlockSpec((Bt, T, E), lambda b: (b, 0, 0)),   # x
        rep((8, H4)),                                    # packed LN/bias vecs
        rep((T, T)),                                     # causal bias (f32)
        rep((E, 3 * E)),                                 # w_qkv bf16
        rep((E, E)),                                     # w_proj bf16
        rep((E, H4)),                                    # w1 bf16
        rep((H4, E)),                                    # w2 bf16
    ]

    return pl.pallas_call(
        block_kernel,
        out_shape=jax.ShapeDtypeStruct((B, T, E), jnp.float32),
        grid=(G,),
        in_specs=in_specs,
        out_specs=pl.BlockSpec((Bt, T, E), lambda b: (b, 0, 0)),
        compiler_params=pltpu.CompilerParams(
            dimension_semantics=("parallel",)),
    )(x, kp["vec"], mask_bias, kp["w_qkv"], kp["w_proj"], kp["w1"], kp["w2"])


def init_params(key, E):
    H = 4 * E
    ks = jax.random.split(key, 10)
    n = lambda k, s: (0.02 * jax.random.normal(k, s)).astype(jnp.float32)
    return {
        "ln1_g": jnp.ones((1, E), jnp.float32),
        "ln1_b": jnp.zeros((1, E), jnp.float32),
        "wq": n(ks[0], (E, E)), "bq": n(ks[1], (1, E)),
        "wk": n(ks[2], (E, E)), "bk": n(ks[3], (1, E)),
        "wv": n(ks[4], (E, E)), "bv": n(ks[5], (1, E)),
        "wproj": n(ks[6], (E, E)), "bproj": jnp.zeros((1, E), jnp.float32),
        "ln2_g": jnp.ones((1, E), jnp.float32),
        "ln2_b": jnp.zeros((1, E), jnp.float32),
        "w1": n(ks[7], (E, H)), "b1": jnp.zeros((1, H), jnp.float32),
        "w2": n(ks[8], (H, E)), "b2": jnp.zeros((1, E), jnp.float32),
    }


def block_reference(x, p):
    """Pure-JAX f32 reference implementing the same math as the PyTorch Block."""
    def ln(z, g, b):
        mu = jnp.mean(z, axis=-1, keepdims=True)
        var = jnp.mean((z - mu) ** 2, axis=-1, keepdims=True)
        return (z - mu) * lax.rsqrt(var + LN_EPS) * g + b

    B, T, E = x.shape
    x1 = ln(x, p["ln1_g"][0], p["ln1_b"][0])
    q = x1 @ p["wq"] + p["bq"][0]
    k = x1 @ p["wk"] + p["bk"][0]
    v = x1 @ p["wv"] + p["bv"][0]
    mask = jnp.tril(jnp.ones((T, T), bool))
    outs = []
    for h in range(N_HEAD):
        sl = slice(h * HEAD_SIZE, (h + 1) * HEAD_SIZE)
        s = jnp.einsum("btd,bsd->bts", q[..., sl], k[..., sl]) * E ** (-0.5)
        s = jnp.where(mask, s, -jnp.inf)
        w = jax.nn.softmax(s, axis=-1)
        outs.append(jnp.einsum("bts,bsd->btd", w, v[..., sl]))
    att = jnp.concatenate(outs, axis=-1) @ p["wproj"] + p["bproj"][0]
    xr = x + att
    x2 = ln(xr, p["ln2_g"][0], p["ln2_b"][0])
    ff = jnp.maximum(x2 @ p["w1"] + p["b1"][0], 0.0) @ p["w2"] + p["b2"][0]
    return xr + ff


if __name__ == "__main__":
    key = jax.random.PRNGKey(0)
    kx, kp = jax.random.split(key)

    B, T, E = 2, 8, N_EMB
    x = jax.random.normal(kx, (B, T, E), jnp.float32)
    params = init_params(kp, E)

    out = block_forward(x, params)
    out = jax.block_until_ready(out)

    ref = block_reference(x, params)
    assert out.shape == (B, T, E)
    # Tolerance accounts for bf16 MXU inputs (f32 accumulation); observed error
    # is well below 1e-3 at these magnitudes.
    assert jnp.allclose(out, ref, atol=5e-3, rtol=5e-3), "mismatch vs reference"

    print("KERNEL_OK")
</pallas_src>

<mosaic_0001>
module attributes {stable_mosaic.version = 11 : i64} {
  func.func @block_kernel(%arg0: i32, %arg1: memref<1x8x32xf32, #tpu.memory_space<vmem>>, %arg2: memref<8x128xf32, #tpu.memory_space<vmem>>, %arg3: memref<8x8xf32, #tpu.memory_space<vmem>>, %arg4: memref<32x96xbf16, #tpu.memory_space<vmem>>, %arg5: memref<32x32xbf16, #tpu.memory_space<vmem>>, %arg6: memref<32x128xbf16, #tpu.memory_space<vmem>>, %arg7: memref<128x32xbf16, #tpu.memory_space<vmem>>, %arg8: memref<1x8x32xf32, #tpu.memory_space<vmem>>) attributes {dimension_semantics = [#tpu.dimension_semantics<parallel>], iteration_bounds = array<i64: 2>, scalar_prefetch = 0 : i64, scratch_operands = 0 : i64, tpu.core_type = #tpu.core_type<tc>, window_params = [{transform_indices = @transform_0, window_bounds = array<i64: 1, 8, 32>}, {pipeline_mode = #tpu.pipeline_mode<synchronous>, transform_indices = @transform_1, window_bounds = array<i64: 8, 128>}, {pipeline_mode = #tpu.pipeline_mode<synchronous>, transform_indices = @transform_2, window_bounds = array<i64: 8, 8>}, {pipeline_mode = #tpu.pipeline_mode<synchronous>, transform_indices = @transform_3, window_bounds = array<i64: 32, 96>}, {pipeline_mode = #tpu.pipeline_mode<synchronous>, transform_indices = @transform_4, window_bounds = array<i64: 32, 32>}, {pipeline_mode = #tpu.pipeline_mode<synchronous>, transform_indices = @transform_5, window_bounds = array<i64: 32, 128>}, {pipeline_mode = #tpu.pipeline_mode<synchronous>, transform_indices = @transform_6, window_bounds = array<i64: 128, 32>}, {transform_indices = @transform_7, window_bounds = array<i64: 1, 8, 32>}]} {
    %c0 = arith.constant 0 : index
    %c0_0 = arith.constant 0 : index
    %0 = vector.load %arg2[%c0, %c0_0] : memref<8x128xf32, #tpu.memory_space<vmem>>, vector<1x32xf32>
    %c1 = arith.constant 1 : index
    %c0_1 = arith.constant 0 : index
    %1 = vector.load %arg2[%c1, %c0_1] : memref<8x128xf32, #tpu.memory_space<vmem>>, vector<1x32xf32>
    %c2 = arith.constant 2 : index
    %c0_2 = arith.constant 0 : index
    %2 = vector.load %arg2[%c2, %c0_2] : memref<8x128xf32, #tpu.memory_space<vmem>>, vector<1x32xf32>
    %c3 = arith.constant 3 : index
    %c0_3 = arith.constant 0 : index
    %3 = vector.load %arg2[%c3, %c0_3] : memref<8x128xf32, #tpu.memory_space<vmem>>, vector<1x32xf32>
    %c4 = arith.constant 4 : index
    %c0_4 = arith.constant 0 : index
    %4 = vector.load %arg2[%c4, %c0_4] : memref<8x128xf32, #tpu.memory_space<vmem>>, vector<1x96xf32>
    %c5 = arith.constant 5 : index
    %c0_5 = arith.constant 0 : index
    %5 = vector.load %arg2[%c5, %c0_5] : memref<8x128xf32, #tpu.memory_space<vmem>>, vector<1x32xf32>
    %c6 = arith.constant 6 : index
    %c0_6 = arith.constant 0 : index
    %6 = vector.load %arg2[%c6, %c0_6] : memref<8x128xf32, #tpu.memory_space<vmem>>, vector<1x128xf32>
    %c7 = arith.constant 7 : index
    %c0_7 = arith.constant 0 : index
    %7 = vector.load %arg2[%c7, %c0_7] : memref<8x128xf32, #tpu.memory_space<vmem>>, vector<1x32xf32>
    %c0_8 = arith.constant 0 : index
    %c0_9 = arith.constant 0 : index
    %c0_10 = arith.constant 0 : index
    %8 = vector.load %arg1[%c0_8, %c0_9, %c0_10] : memref<1x8x32xf32, #tpu.memory_space<vmem>>, vector<1x8x32xf32>
    %9 = vector.shape_cast %8 : vector<1x8x32xf32> to vector<8x32xf32>
    %cst = arith.constant dense<0.000000e+00> : vector<8xf32>
    %10 = vector.multi_reduction <add>, %9, %cst [1] : vector<8x32xf32> to vector<8xf32>
    %11 = vector.shape_cast %10 : vector<8xf32> to vector<8x1xf32>
    %cst_11 = arith.constant 3.200000e+01 : f32
    %12 = vector.broadcast %cst_11 : f32 to vector<8x1xf32>
    %13 = arith.divf %11, %12 : vector<8x1xf32>
    %14 = vector.broadcast %13 : vector<8x1xf32> to vector<8x32xf32>
    %15 = arith.subf %9, %14 : vector<8x32xf32>
    %16 = arith.mulf %15, %15 : vector<8x32xf32>
    %cst_12 = arith.constant dense<0.000000e+00> : vector<8xf32>
    %17 = vector.multi_reduction <add>, %16, %cst_12 [1] : vector<8x32xf32> to vector<8xf32>
    %18 = vector.shape_cast %17 : vector<8xf32> to vector<8x1xf32>
    %cst_13 = arith.constant 3.200000e+01 : f32
    %19 = vector.broadcast %cst_13 : f32 to vector<8x1xf32>
    %20 = arith.divf %18, %19 : vector<8x1xf32>
    %21 = vector.broadcast %13 : vector<8x1xf32> to vector<8x32xf32>
    %22 = arith.subf %9, %21 : vector<8x32xf32>
    %cst_14 = arith.constant 9.99999974E-6 : f32
    %23 = vector.broadcast %cst_14 : f32 to vector<8x1xf32>
    %24 = arith.addf %20, %23 : vector<8x1xf32>
    %25 = math.rsqrt %24 : vector<8x1xf32>
    %26 = vector.broadcast %25 : vector<8x1xf32> to vector<8x32xf32>
    %27 = arith.mulf %22, %26 : vector<8x32xf32>
    %28 = vector.broadcast %0 : vector<1x32xf32> to vector<8x32xf32>
    %29 = arith.mulf %27, %28 : vector<8x32xf32>
    %30 = vector.broadcast %1 : vector<1x32xf32> to vector<8x32xf32>
    %31 = arith.addf %29, %30 : vector<8x32xf32>
    %32 = arith.truncf %31 : vector<8x32xf32> to vector<8x32xbf16>
    %c0_15 = arith.constant 0 : index
    %c0_16 = arith.constant 0 : index
    %33 = vector.load %arg4[%c0_15, %c0_16] : memref<32x96xbf16, #tpu.memory_space<vmem>>, vector<32x96xbf16>
    %cst_17 = arith.constant dense<0.000000e+00> : vector<8x96xf32>
    %34 = tpu.matmul %32, %33, %cst_17 {dimension_numbers = #tpu.dot_dimension_numbers<[1], [0], [0], [1], [0, 0, 1, 1], [], []>} : vector<8x32xbf16>, vector<32x96xbf16>, vector<8x96xf32> -> vector<8x96xf32>
    %35 = vector.broadcast %4 : vector<1x96xf32> to vector<8x96xf32>
    %36 = arith.addf %34, %35 : vector<8x96xf32>
    %37 = vector.extract_strided_slice %36 {offsets = [0, 0], sizes = [8, 32], strides = [1, 1]} : vector<8x96xf32> to vector<8x32xf32>
    %cst_18 = arith.constant 0.176776692 : f32
    %38 = vector.broadcast %cst_18 : f32 to vector<8x32xf32>
    %39 = arith.mulf %37, %38 : vector<8x32xf32>
    %40 = vector.extract_strided_slice %36 {offsets = [0, 32], sizes = [8, 32], strides = [1, 1]} : vector<8x96xf32> to vector<8x32xf32>
    %41 = vector.extract_strided_slice %36 {offsets = [0, 64], sizes = [8, 32], strides = [1, 1]} : vector<8x96xf32> to vector<8x32xf32>
    %42 = vector.shape_cast %39 : vector<8x32xf32> to vector<1x8x32xf32>
    %43 = vector.shape_cast %40 : vector<8x32xf32> to vector<1x8x32xf32>
    %44 = vector.shape_cast %41 : vector<8x32xf32> to vector<1x8x32xf32>
    %c0_19 = arith.constant 0 : index
    %c0_20 = arith.constant 0 : index
    %45 = vector.load %arg3[%c0_19, %c0_20] : memref<8x8xf32, #tpu.memory_space<vmem>>, vector<8x8xf32>
    %46 = vector.extract_strided_slice %42 {offsets = [0, 0, 0], sizes = [1, 8, 8], strides = [1, 1, 1]} : vector<1x8x32xf32> to vector<1x8x8xf32>
    %47 = arith.truncf %46 : vector<1x8x8xf32> to vector<1x8x8xbf16>
    %48 = vector.extract_strided_slice %43 {offsets = [0, 0, 0], sizes = [1, 8, 8], strides = [1, 1, 1]} : vector<1x8x32xf32> to vector<1x8x8xf32>
    %49 = arith.truncf %48 : vector<1x8x8xf32> to vector<1x8x8xbf16>
    "tpu.trace_start"() <{level = 10 : i32, message = "bqd,bkd->bqk"}> : () -> ()
    %cst_21 = arith.constant dense<0.000000e+00> : vector<1x8x8xf32>
    %50 = tpu.matmul %47, %49, %cst_21 {dimension_numbers = #tpu.dot_dimension_numbers<[2], [2], [1], [1], [0, 0, 0, 1, 1, 1], [0], [0]>} : vector<1x8x8xbf16>, vector<1x8x8xbf16>, vector<1x8x8xf32> -> vector<1x8x8xf32>
    "tpu.trace_stop"() : () -> ()
    %51 = vector.shape_cast %45 : vector<8x8xf32> to vector<1x8x8xf32>
    %52 = arith.addf %50, %51 : vector<1x8x8xf32>
    %cst_22 = arith.constant dense<0xFF800000> : vector<1x8xf32>
    %53 = vector.multi_reduction <maximumf>, %52, %cst_22 [2] : vector<1x8x8xf32> to vector<1x8xf32>
    %54 = vector.shape_cast %53 : vector<1x8xf32> to vector<1x8x1xf32>
    %55 = vector.broadcast %54 : vector<1x8x1xf32> to vector<1x8x8xf32>
    %56 = arith.subf %52, %55 : vector<1x8x8xf32>
    %57 = math.exp %56 : vector<1x8x8xf32>
    %cst_23 = arith.constant dense<0.000000e+00> : vector<1x8xf32>
    %58 = vector.multi_reduction <add>, %57, %cst_23 [2] : vector<1x8x8xf32> to vector<1x8xf32>
    %59 = vector.shape_cast %58 : vector<1x8xf32> to vector<1x8x1xf32>
    %60 = vector.broadcast %59 : vector<1x8x1xf32> to vector<1x8x8xf32>
    %61 = arith.divf %57, %60 : vector<1x8x8xf32>
    %62 = arith.truncf %61 : vector<1x8x8xf32> to vector<1x8x8xbf16>
    %63 = vector.extract_strided_slice %44 {offsets = [0, 0, 0], sizes = [1, 8, 8], strides = [1, 1, 1]} : vector<1x8x32xf32> to vector<1x8x8xf32>
    %64 = arith.truncf %63 : vector<1x8x8xf32> to vector<1x8x8xbf16>
    "tpu.trace_start"() <{level = 10 : i32, message = "bqk,bkd->bqd"}> : () -> ()
    %cst_24 = arith.constant dense<0.000000e+00> : vector<1x8x8xf32>
    %65 = tpu.matmul %62, %64, %cst_24 {dimension_numbers = #tpu.dot_dimension_numbers<[2], [1], [1], [2], [0, 0, 0, 1, 1, 2], [0], [0]>} : vector<1x8x8xbf16>, vector<1x8x8xbf16>, vector<1x8x8xf32> -> vector<1x8x8xf32>
    "tpu.trace_stop"() : () -> ()
    %66 = vector.extract_strided_slice %42 {offsets = [0, 0, 8], sizes = [1, 8, 8], strides = [1, 1, 1]} : vector<1x8x32xf32> to vector<1x8x8xf32>
    %67 = arith.truncf %66 : vector<1x8x8xf32> to vector<1x8x8xbf16>
    %68 = vector.extract_strided_slice %43 {offsets = [0, 0, 8], sizes = [1, 8, 8], strides = [1, 1, 1]} : vector<1x8x32xf32> to vector<1x8x8xf32>
    %69 = arith.truncf %68 : vector<1x8x8xf32> to vector<1x8x8xbf16>
    "tpu.trace_start"() <{level = 10 : i32, message = "bqd,bkd->bqk"}> : () -> ()
    %cst_25 = arith.constant dense<0.000000e+00> : vector<1x8x8xf32>
    %70 = tpu.matmul %67, %69, %cst_25 {dimension_numbers = #tpu.dot_dimension_numbers<[2], [2], [1], [1], [0, 0, 0, 1, 1, 1], [0], [0]>} : vector<1x8x8xbf16>, vector<1x8x8xbf16>, vector<1x8x8xf32> -> vector<1x8x8xf32>
    "tpu.trace_stop"() : () -> ()
    %71 = vector.shape_cast %45 : vector<8x8xf32> to vector<1x8x8xf32>
    %72 = arith.addf %70, %71 : vector<1x8x8xf32>
    %cst_26 = arith.constant dense<0xFF800000> : vector<1x8xf32>
    %73 = vector.multi_reduction <maximumf>, %72, %cst_26 [2] : vector<1x8x8xf32> to vector<1x8xf32>
    %74 = vector.shape_cast %73 : vector<1x8xf32> to vector<1x8x1xf32>
    %75 = vector.broadcast %74 : vector<1x8x1xf32> to vector<1x8x8xf32>
    %76 = arith.subf %72, %75 : vector<1x8x8xf32>
    %77 = math.exp %76 : vector<1x8x8xf32>
    %cst_27 = arith.constant dense<0.000000e+00> : vector<1x8xf32>
    %78 = vector.multi_reduction <add>, %77, %cst_27 [2] : vector<1x8x8xf32> to vector<1x8xf32>
    %79 = vector.shape_cast %78 : vector<1x8xf32> to vector<1x8x1xf32>
    %80 = vector.broadcast %79 : vector<1x8x1xf32> to vector<1x8x8xf32>
    %81 = arith.divf %77, %80 : vector<1x8x8xf32>
    %82 = arith.truncf %81 : vector<1x8x8xf32> to vector<1x8x8xbf16>
    %83 = vector.extract_strided_slice %44 {offsets = [0, 0, 8], sizes = [1, 8, 8], strides = [1, 1, 1]} : vector<1x8x32xf32> to vector<1x8x8xf32>
    %84 = arith.truncf %83 : vector<1x8x8xf32> to vector<1x8x8xbf16>
    "tpu.trace_start"() <{level = 10 : i32, message = "bqk,bkd->bqd"}> : () -> ()
    %cst_28 = arith.constant dense<0.000000e+00> : vector<1x8x8xf32>
    %85 = tpu.matmul %82, %84, %cst_28 {dimension_numbers = #tpu.dot_dimension_numbers<[2], [1], [1], [2], [0, 0, 0, 1, 1, 2], [0], [0]>} : vector<1x8x8xbf16>, vector<1x8x8xbf16>, vector<1x8x8xf32> -> vector<1x8x8xf32>
    "tpu.trace_stop"() : () -> ()
    %86 = vector.extract_strided_slice %42 {offsets = [0, 0, 16], sizes = [1, 8, 8], strides = [1, 1, 1]} : vector<1x8x32xf32> to vector<1x8x8xf32>
    %87 = arith.truncf %86 : vector<1x8x8xf32> to vector<1x8x8xbf16>
    %88 = vector.extract_strided_slice %43 {offsets = [0, 0, 16], sizes = [1, 8, 8], strides = [1, 1, 1]} : vector<1x8x32xf32> to vector<1x8x8xf32>
    %89 = arith.truncf %88 : vector<1x8x8xf32> to vector<1x8x8xbf16>
    "tpu.trace_start"() <{level = 10 : i32, message = "bqd,bkd->bqk"}> : () -> ()
    %cst_29 = arith.constant dense<0.000000e+00> : vector<1x8x8xf32>
    %90 = tpu.matmul %87, %89, %cst_29 {dimension_numbers = #tpu.dot_dimension_numbers<[2], [2], [1], [1], [0, 0, 0, 1, 1, 1], [0], [0]>} : vector<1x8x8xbf16>, vector<1x8x8xbf16>, vector<1x8x8xf32> -> vector<1x8x8xf32>
    "tpu.trace_stop"() : () -> ()
    %91 = vector.shape_cast %45 : vector<8x8xf32> to vector<1x8x8xf32>
    %92 = arith.addf %90, %91 : vector<1x8x8xf32>
    %cst_30 = arith.constant dense<0xFF800000> : vector<1x8xf32>
    %93 = vector.multi_reduction <maximumf>, %92, %cst_30 [2] : vector<1x8x8xf32> to vector<1x8xf32>
    %94 = vector.shape_cast %93 : vector<1x8xf32> to vector<1x8x1xf32>
    %95 = vector.broadcast %94 : vector<1x8x1xf32> to vector<1x8x8xf32>
    %96 = arith.subf %92, %95 : vector<1x8x8xf32>
    %97 = math.exp %96 : vector<1x8x8xf32>
    %cst_31 = arith.constant dense<0.000000e+00> : vector<1x8xf32>
    %98 = vector.multi_reduction <add>, %97, %cst_31 [2] : vector<1x8x8xf32> to vector<1x8xf32>
    %99 = vector.shape_cast %98 : vector<1x8xf32> to vector<1x8x1xf32>
    %100 = vector.broadcast %99 : vector<1x8x1xf32> to vector<1x8x8xf32>
    %101 = arith.divf %97, %100 : vector<1x8x8xf32>
    %102 = arith.truncf %101 : vector<1x8x8xf32> to vector<1x8x8xbf16>
    %103 = vector.extract_strided_slice %44 {offsets = [0, 0, 16], sizes = [1, 8, 8], strides = [1, 1, 1]} : vector<1x8x32xf32> to vector<1x8x8xf32>
    %104 = arith.truncf %103 : vector<1x8x8xf32> to vector<1x8x8xbf16>
    "tpu.trace_start"() <{level = 10 : i32, message = "bqk,bkd->bqd"}> : () -> ()
    %cst_32 = arith.constant dense<0.000000e+00> : vector<1x8x8xf32>
    %105 = tpu.matmul %102, %104, %cst_32 {dimension_numbers = #tpu.dot_dimension_numbers<[2], [1], [1], [2], [0, 0, 0, 1, 1, 2], [0], [0]>} : vector<1x8x8xbf16>, vector<1x8x8xbf16>, vector<1x8x8xf32> -> vector<1x8x8xf32>
    "tpu.trace_stop"() : () -> ()
    %106 = vector.extract_strided_slice %42 {offsets = [0, 0, 24], sizes = [1, 8, 8], strides = [1, 1, 1]} : vector<1x8x32xf32> to vector<1x8x8xf32>
    %107 = arith.truncf %106 : vector<1x8x8xf32> to vector<1x8x8xbf16>
    %108 = vector.extract_strided_slice %43 {offsets = [0, 0, 24], sizes = [1, 8, 8], strides = [1, 1, 1]} : vector<1x8x32xf32> to vector<1x8x8xf32>
    %109 = arith.truncf %108 : vector<1x8x8xf32> to vector<1x8x8xbf16>
    "tpu.trace_start"() <{level = 10 : i32, message = "bqd,bkd->bqk"}> : () -> ()
    %cst_33 = arith.constant dense<0.000000e+00> : vector<1x8x8xf32>
    %110 = tpu.matmul %107, %109, %cst_33 {dimension_numbers = #tpu.dot_dimension_numbers<[2], [2], [1], [1], [0, 0, 0, 1, 1, 1], [0], [0]>} : vector<1x8x8xbf16>, vector<1x8x8xbf16>, vector<1x8x8xf32> -> vector<1x8x8xf32>
    "tpu.trace_stop"() : () -> ()
    %111 = vector.shape_cast %45 : vector<8x8xf32> to vector<1x8x8xf32>
    %112 = arith.addf %110, %111 : vector<1x8x8xf32>
    %cst_34 = arith.constant dense<0xFF800000> : vector<1x8xf32>
    %113 = vector.multi_reduction <maximumf>, %112, %cst_34 [2] : vector<1x8x8xf32> to vector<1x8xf32>
    %114 = vector.shape_cast %113 : vector<1x8xf32> to vector<1x8x1xf32>
    %115 = vector.broadcast %114 : vector<1x8x1xf32> to vector<1x8x8xf32>
    %116 = arith.subf %112, %115 : vector<1x8x8xf32>
    %117 = math.exp %116 : vector<1x8x8xf32>
    %cst_35 = arith.constant dense<0.000000e+00> : vector<1x8xf32>
    %118 = vector.multi_reduction <add>, %117, %cst_35 [2] : vector<1x8x8xf32> to vector<1x8xf32>
    %119 = vector.shape_cast %118 : vector<1x8xf32> to vector<1x8x1xf32>
    %120 = vector.broadcast %119 : vector<1x8x1xf32> to vector<1x8x8xf32>
    %121 = arith.divf %117, %120 : vector<1x8x8xf32>
    %122 = arith.truncf %121 : vector<1x8x8xf32> to vector<1x8x8xbf16>
    %123 = vector.extract_strided_slice %44 {offsets = [0, 0, 24], sizes = [1, 8, 8], strides = [1, 1, 1]} : vector<1x8x32xf32> to vector<1x8x8xf32>
    %124 = arith.truncf %123 : vector<1x8x8xf32> to vector<1x8x8xbf16>
    "tpu.trace_start"() <{level = 10 : i32, message = "bqk,bkd->bqd"}> : () -> ()
    %cst_36 = arith.constant dense<0.000000e+00> : vector<1x8x8xf32>
    %125 = tpu.matmul %122, %124, %cst_36 {dimension_numbers = #tpu.dot_dimension_numbers<[2], [1], [1], [2], [0, 0, 0, 1, 1, 2], [0], [0]>} : vector<1x8x8xbf16>, vector<1x8x8xbf16>, vector<1x8x8xf32> -> vector<1x8x8xf32>
    "tpu.trace_stop"() : () -> ()
    %126 = tpu.concatenate %65, %85, %105, %125 in 2 : vector<1x8x8xf32>, vector<1x8x8xf32>, vector<1x8x8xf32>, vector<1x8x8xf32> -> vector<1x8x32xf32>
    %127 = vector.shape_cast %126 : vector<1x8x32xf32> to vector<8x32xf32>
    %128 = arith.truncf %127 : vector<8x32xf32> to vector<8x32xbf16>
    %c0_37 = arith.constant 0 : index
    %c0_38 = arith.constant 0 : index
    %129 = vector.load %arg5[%c0_37, %c0_38] : memref<32x32xbf16, #tpu.memory_space<vmem>>, vector<32x32xbf16>
    %cst_39 = arith.constant dense<0.000000e+00> : vector<8x32xf32>
    %130 = tpu.matmul %128, %129, %cst_39 {dimension_numbers = #tpu.dot_dimension_numbers<[1], [0], [0], [1], [0, 0, 1, 1], [], []>} : vector<8x32xbf16>, vector<32x32xbf16>, vector<8x32xf32> -> vector<8x32xf32>
    %131 = vector.broadcast %5 : vector<1x32xf32> to vector<8x32xf32>
    %132 = arith.addf %130, %131 : vector<8x32xf32>
    %133 = arith.addf %9, %132 : vector<8x32xf32>
    %cst_40 = arith.constant dense<0.000000e+00> : vector<8xf32>
    %134 = vector.multi_reduction <add>, %133, %cst_40 [1] : vector<8x32xf32> to vector<8xf32>
    %135 = vector.shape_cast %134 : vector<8xf32> to vector<8x1xf32>
    %cst_41 = arith.constant 3.200000e+01 : f32
    %136 = vector.broadcast %cst_41 : f32 to vector<8x1xf32>
    %137 = arith.divf %135, %136 : vector<8x1xf32>
    %138 = vector.broadcast %137 : vector<8x1xf32> to vector<8x32xf32>
    %139 = arith.subf %133, %138 : vector<8x32xf32>
    %140 = arith.mulf %139, %139 : vector<8x32xf32>
    %cst_42 = arith.constant dense<0.000000e+00> : vector<8xf32>
    %141 = vector.multi_reduction <add>, %140, %cst_42 [1] : vector<8x32xf32> to vector<8xf32>
    %142 = vector.shape_cast %141 : vector<8xf32> to vector<8x1xf32>
    %cst_43 = arith.constant 3.200000e+01 : f32
    %143 = vector.broadcast %cst_43 : f32 to vector<8x1xf32>
    %144 = arith.divf %142, %143 : vector<8x1xf32>
    %145 = vector.broadcast %137 : vector<8x1xf32> to vector<8x32xf32>
    %146 = arith.subf %133, %145 : vector<8x32xf32>
    %cst_44 = arith.constant 9.99999974E-6 : f32
    %147 = vector.broadcast %cst_44 : f32 to vector<8x1xf32>
    %148 = arith.addf %144, %147 : vector<8x1xf32>
    %149 = math.rsqrt %148 : vector<8x1xf32>
    %150 = vector.broadcast %149 : vector<8x1xf32> to vector<8x32xf32>
    %151 = arith.mulf %146, %150 : vector<8x32xf32>
    %152 = vector.broadcast %2 : vector<1x32xf32> to vector<8x32xf32>
    %153 = arith.mulf %151, %152 : vector<8x32xf32>
    %154 = vector.broadcast %3 : vector<1x32xf32> to vector<8x32xf32>
    %155 = arith.addf %153, %154 : vector<8x32xf32>
    %156 = arith.truncf %155 : vector<8x32xf32> to vector<8x32xbf16>
    %c0_45 = arith.constant 0 : index
    %c0_46 = arith.constant 0 : index
    %157 = vector.load %arg6[%c0_45, %c0_46] : memref<32x128xbf16, #tpu.memory_space<vmem>>, vector<32x128xbf16>
    %cst_47 = arith.constant dense<0.000000e+00> : vector<8x128xf32>
    %158 = tpu.matmul %156, %157, %cst_47 {dimension_numbers = #tpu.dot_dimension_numbers<[1], [0], [0], [1], [0, 0, 1, 1], [], []>} : vector<8x32xbf16>, vector<32x128xbf16>, vector<8x128xf32> -> vector<8x128xf32>
    %159 = vector.broadcast %6 : vector<1x128xf32> to vector<8x128xf32>
    %160 = arith.addf %158, %159 : vector<8x128xf32>
    %cst_48 = arith.constant 0.000000e+00 : f32
    %161 = vector.broadcast %cst_48 : f32 to vector<8x128xf32>
    %162 = arith.maximumf %160, %161 : vector<8x128xf32>
    %163 = arith.truncf %162 : vector<8x128xf32> to vector<8x128xbf16>
    %c0_49 = arith.constant 0 : index
    %c0_50 = arith.constant 0 : index
    %164 = vector.load %arg7[%c0_49, %c0_50] : memref<128x32xbf16, #tpu.memory_space<vmem>>, vector<128x32xbf16>
    %cst_51 = arith.constant dense<0.000000e+00> : vector<8x32xf32>
    %165 = tpu.matmul %163, %164, %cst_51 {dimension_numbers = #tpu.dot_dimension_numbers<[1], [0], [0], [1], [0, 0, 1, 1], [], []>} : vector<8x128xbf16>, vector<128x32xbf16>, vector<8x32xf32> -> vector<8x32xf32>
    %166 = vector.broadcast %7 : vector<1x32xf32> to vector<8x32xf32>
    %167 = arith.addf %165, %166 : vector<8x32xf32>
    %168 = arith.addf %133, %167 : vector<8x32xf32>
    %169 = vector.shape_cast %168 : vector<8x32xf32> to vector<1x8x32xf32>
    %c0_52 = arith.constant 0 : index
    %c0_53 = arith.constant 0 : index
    %c0_54 = arith.constant 0 : index
    %170 = vector.load %arg8[%c0_52, %c0_53, %c0_54] : memref<1x8x32xf32, #tpu.memory_space<vmem>>, vector<1x8x32xf32>
    tpu.vector_store %arg8[%c0_52, %c0_53, %c0_54], %169 {strides = array<i32>} : memref<1x8x32xf32, #tpu.memory_space<vmem>>, vector<1x8x32xf32>,
    return
  }
  func.func @transform_0(%arg0: i32) -> (i32, i32, i32) {
    %c0_i32 = arith.constant 0 : i32
    %c0_i32_0 = arith.constant 0 : i32
    %c0_i32_1 = arith.constant 0 : i32
    return %arg0, %c0_i32, %c0_i32_0 : i32, i32, i32
  }
  func.func @transform_1(%arg0: i32) -> (i32, i32) {
    %c0_i32 = arith.constant 0 : i32
    %c0_i32_0 = arith.constant 0 : i32
    %c0_i32_1 = arith.constant 0 : i32
    return %c0_i32, %c0_i32_0 : i32, i32
  }
  func.func @transform_2(%arg0: i32) -> (i32, i32) {
    %c0_i32 = arith.constant 0 : i32
    %c0_i32_0 = arith.constant 0 : i32
    %c0_i32_1 = arith.constant 0 : i32
    return %c0_i32, %c0_i32_0 : i32, i32
  }
  func.func @transform_3(%arg0: i32) -> (i32, i32) {
    %c0_i32 = arith.constant 0 : i32
    %c0_i32_0 = arith.constant 0 : i32
    %c0_i32_1 = arith.constant 0 : i32
    return %c0_i32, %c0_i32_0 : i32, i32
  }
  func.func @transform_4(%arg0: i32) -> (i32, i32) {
    %c0_i32 = arith.constant 0 : i32
    %c0_i32_0 = arith.constant 0 : i32
    %c0_i32_1 = arith.constant 0 : i32
    return %c0_i32, %c0_i32_0 : i32, i32
  }
  func.func @transform_5(%arg0: i32) -> (i32, i32) {
    %c0_i32 = arith.constant 0 : i32
    %c0_i32_0 = arith.constant 0 : i32
    %c0_i32_1 = arith.constant 0 : i32
    return %c0_i32, %c0_i32_0 : i32, i32
  }
  func.func @transform_6(%arg0: i32) -> (i32, i32) {
    %c0_i32 = arith.constant 0 : i32
    %c0_i32_0 = arith.constant 0 : i32
    %c0_i32_1 = arith.constant 0 : i32
    return %c0_i32, %c0_i32_0 : i32, i32
  }
  func.func @transform_7(%arg0: i32) -> (i32, i32, i32) {
    %c0_i32 = arith.constant 0 : i32
    %c0_i32_0 = arith.constant 0 : i32
    %c0_i32_1 = arith.constant 0 : i32
    return %arg0, %c0_i32, %c0_i32_0 : i32, i32, i32
  }
}

</mosaic_0001>

<llo_original>
// kernel: tpu_custom_call.1
$region0: #{tpu_custom_call.1}
  #allocation0 [shape = 'u32[]', space=smem, size = 0x4, offset = 0x4, fixed_abs, tag = 'smem constant byte address 0x4 - core index']
  #allocation1 [shape = 'u32[72,128]{1,0:T(1,128)}', space=vmem, size = 0x9000, scoped, tag = 'internal scratch']
  %s0 = inlined_call_operand.vmem [shape: f32[2,8,32], index: 0, kind: input, shape index: {}]
  %s1 = inlined_call_operand.vmem [shape: f32[8,128], index: 1, kind: input, shape index: {}]
  %s2 = inlined_call_operand.vmem [shape: f32[8,8], index: 2, kind: input, shape index: {}]
  %s3 = inlined_call_operand.vmem [shape: bf16[32,96], index: 3, kind: input, shape index: {}]
  %s4 = inlined_call_operand.vmem [shape: bf16[32,32], index: 4, kind: input, shape index: {}]
  %s5 = inlined_call_operand.vmem [shape: bf16[32,128], index: 5, kind: input, shape index: {}]
  %s6 = inlined_call_operand.vmem [shape: bf16[128,32], index: 6, kind: input, shape index: {}]
  %s7 = inlined_call_operand.hbm [shape: f32[2,8,32], index: 7, kind: output, shape index: {}]
  %s8 = sld [smem:[#allocation0]]
  $region61: #{tpu_custom_call.1} parent=0
    _
  %s10 = ssub.s32 1, %s8
  %s11 = scalar_select 0, %s10, %s8
  $region1: #{tpu_custom_call.1} parent=0
    #allocation2 [shape = 'u8[8192]{0}', space=vmem, size = 0x2000, scoped, tag = 'output window, operand 0']
    #allocation3 [shape = 's32[2]{0}', space=sflag, size = 0x8, scoped, tag = 'scoped memory for tpu_custom_call.1']
    %12 = vsyncpa [#allocation3], 0
    %s13 = scalar_lea.sflag [#allocation3], 1
    %14 = vsyncpa %s13, 0
    loop: start=0, step=1, limit=4
    $region2: #{tpu_custom_call.1} parent=1 // loop_pre_header
      _
    $region3: #{tpu_custom_call.1} parent=1 // loop_header
      %s16 = sphi 0, %s20
      %p17 = scmp.ge.s32.totalorder %s16, 4
      %s26 = sphi 0, %s28
      %s29 = sphi 0, %s26
      %s30 = sphi 0, %s29
      %s46 = sphi 0, %s30
      %s50 = sphi 0, %s50
      %s52 = sphi 0, %s50
      %s53 = sphi 0, %s52
      %s67 = sphi 0, %s53
      %s71 = sphi 0, %s71
      %s73 = sphi 0, %s71
      %s74 = sphi 0, %s73
      %s88 = sphi 0, %s74
      %s92 = sphi 0, %s92
      %s94 = sphi 0, %s92
      %s95 = sphi 0, %s94
      %s109 = sphi 0, %s95
      %s113 = sphi 0, %s113
      %s115 = sphi 0, %s113
      %s116 = sphi 0, %s115
      %s130 = sphi 0, %s116
      %s134 = sphi 0, %s134
      %s136 = sphi 0, %s134
      %s137 = sphi 0, %s136
      %s151 = sphi 0, %s137
      %s155 = sphi 0, %s155
      %s157 = sphi 0, %s155
      %s158 = sphi 0, %s157
      %s172 = sphi 0, %s158
      %s178 = sphi 0, %s180
      %s181 = sphi 0, %s178
      %s182 = sphi 0, %s181
      %s198 = sphi 0, %s182
    $region4: #{tpu_custom_call.1} parent=1 // loop_header_branch
      %19 = sbr.rel (%p17) target = $region8
    $region5: #{tpu_custom_call.1} parent=1 // loop_body
      %s21 = ssub.s32 %s16, 1
      %s22 = ssub.s32 %s16, 2
      %s23 = sadd.s32 %s16, 1
      %s24 = ssub.s32 %s16, %s23
      %p25 = scmp.eq.s32.totalorder %s24, 0
      %s27 = sadd.s32 %s26, 1
      %s28 = scalar_select %p25, %s26, %s27
      %p31 = pneg %p25
      %p32 = scmp.eq.s32.totalorder %s16, 1
      %p33 = por %p31, %p32
      %p34 = scmp.ne.s32.totalorder %s26, %s29
      %p35 = scmp.eq.s32.totalorder %s16, 0
      %p36 = por %p34, %p35
      %p37 = scmp.ne.s32.totalorder %s26, %s29
      %p38 = scmp.eq.s32.totalorder %s21, 1
      %p39 = por %p37, %p38
      %p40 = scmp.ne.s32.totalorder %s29, %s30
      %p41 = scmp.eq.s32.totalorder %s21, 0
      %p42 = por %p40, %p41
      %p43 = scmp.ne.s32.totalorder %s29, %s30
      %p44 = scmp.eq.s32.totalorder %s22, 1
      %p45 = por %p43, %p44
      %p47 = scmp.ne.s32.totalorder %s30, %s46
      %p48 = scmp.eq.s32.totalorder %s22, 0
      %p49 = por %p47, %p48
      %s51 = sadd.s32 %s50, 1
      %p54 = scmp.eq.s32.totalorder %s16, 1
      %p55 = scmp.ne.s32.totalorder %s50, %s52
      %p56 = scmp.eq.s32.totalorder %s16, 0
      %p57 = por %p55, %p56
      %p58 = scmp.ne.s32.totalorder %s50, %s52
      %p59 = scmp.eq.s32.totalorder %s21, 1
      %p60 = por %p58, %p59
      %p61 = scmp.ne.s32.totalorder %s52, %s53
      %p62 = scmp.eq.s32.totalorder %s21, 0
      %p63 = por %p61, %p62
      %p64 = scmp.ne.s32.totalorder %s52, %s53
      %p65 = scmp.eq.s32.totalorder %s22, 1
      %p66 = por %p64, %p65
      %p68 = scmp.ne.s32.totalorder %s53, %s67
      %p69 = scmp.eq.s32.totalorder %s22, 0
      %p70 = por %p68, %p69
      %s72 = sadd.s32 %s71, 1
      %p75 = scmp.eq.s32.totalorder %s16, 1
      %p76 = scmp.ne.s32.totalorder %s71, %s73
      %p77 = scmp.eq.s32.totalorder %s16, 0
      %p78 = por %p76, %p77
      %p79 = scmp.ne.s32.totalorder %s71, %s73
      %p80 = scmp.eq.s32.totalorder %s21, 1
      %p81 = por %p79, %p80
      %p82 = scmp.ne.s32.totalorder %s73, %s74
      %p83 = scmp.eq.s32.totalorder %s21, 0
      %p84 = por %p82, %p83
      %p85 = scmp.ne.s32.totalorder %s73, %s74
      %p86 = scmp.eq.s32.totalorder %s22, 1
      %p87 = por %p85, %p86
      %p89 = scmp.ne.s32.totalorder %s74, %s88
      %p90 = scmp.eq.s32.totalorder %s22, 0
      %p91 = por %p89, %p90
      %s93 = sadd.s32 %s92, 1
      %p96 = scmp.eq.s32.totalorder %s16, 1
      %p97 = scmp.ne.s32.totalorder %s92, %s94
      %p98 = scmp.eq.s32.totalorder %s16, 0
      %p99 = por %p97, %p98
      %p100 = scmp.ne.s32.totalorder %s92, %s94
      %p101 = scmp.eq.s32.totalorder %s21, 1
      %p102 = por %p100, %p101
      %p103 = scmp.ne.s32.totalorder %s94, %s95
      %p104 = scmp.eq.s32.totalorder %s21, 0
      %p105 = por %p103, %p104
      %p106 = scmp.ne.s32.totalorder %s94, %s95
      %p107 = scmp.eq.s32.totalorder %s22, 1
      %p108 = por %p106, %p107
      %p110 = scmp.ne.s32.totalorder %s95, %s109
      %p111 = scmp.eq.s32.totalorder %s22, 0
      %p112 = por %p110, %p111
      %s114 = sadd.s32 %s113, 1
      %p117 = scmp.eq.s32.totalorder %s16, 1
      %p118 = scmp.ne.s32.totalorder %s113, %s115
      %p119 = scmp.eq.s32.totalorder %s16, 0
      %p120 = por %p118, %p119
      %p121 = scmp.ne.s32.totalorder %s113, %s115
      %p122 = scmp.eq.s32.totalorder %s21, 1
      %p123 = por %p121, %p122
      %p124 = scmp.ne.s32.totalorder %s115, %s116
      %p125 = scmp.eq.s32.totalorder %s21, 0
      %p126 = por %p124, %p125
      %p127 = scmp.ne.s32.totalorder %s115, %s116
      %p128 = scmp.eq.s32.totalorder %s22, 1
      %p129 = por %p127, %p128
      %p131 = scmp.ne.s32.totalorder %s116, %s130
      %p132 = scmp.eq.s32.totalorder %s22, 0
      %p133 = por %p131, %p132
      %s135 = sadd.s32 %s134, 1
      %p138 = scmp.eq.s32.totalorder %s16, 1
      %p139 = scmp.ne.s32.totalorder %s134, %s136
      %p140 = scmp.eq.s32.totalorder %s16, 0
      %p141 = por %p139, %p140
      %p142 = scmp.ne.s32.totalorder %s134, %s136
      %p143 = scmp.eq.s32.totalorder %s21, 1
      %p144 = por %p142, %p143
      %p145 = scmp.ne.s32.totalorder %s136, %s137
      %p146 = scmp.eq.s32.totalorder %s21, 0
      %p147 = por %p145, %p146
      %p148 = scmp.ne.s32.totalorder %s136, %s137
      %p149 = scmp.eq.s32.totalorder %s22, 1
      %p150 = por %p148, %p149
      %p152 = scmp.ne.s32.totalorder %s137, %s151
      %p153 = scmp.eq.s32.totalorder %s22, 0
      %p154 = por %p152, %p153
      %s156 = sadd.s32 %s155, 1
      %p159 = scmp.eq.s32.totalorder %s16, 1
      %p160 = scmp.ne.s32.totalorder %s155, %s157
      %p161 = scmp.eq.s32.totalorder %s16, 0
      %p162 = por %p160, %p161
      %p163 = scmp.ne.s32.totalorder %s155, %s157
      %p164 = scmp.eq.s32.totalorder %s21, 1
      %p165 = por %p163, %p164
      %p166 = scmp.ne.s32.totalorder %s157, %s158
      %p167 = scmp.eq.s32.totalorder %s21, 0
      %p168 = por %p166, %p167
      %p169 = scmp.ne.s32.totalorder %s157, %s158
      %p170 = scmp.eq.s32.totalorder %s22, 1
      %p171 = por %p169, %p170
      %p173 = scmp.ne.s32.totalorder %s158, %s172
      %p174 = scmp.eq.s32.totalorder %s22, 0
      %p175 = por %p173, %p174
      %s176 = ssub.s32 %s16, %s23
      %p177 = scmp.eq.s32.totalorder %s176, 0
      %s179 = sadd.s32 %s178, 1
      %s180 = scalar_select %p177, %s178, %s179
      %p183 = pneg %p177
      %p184 = scmp.eq.s32.totalorder %s16, 1
      %p185 = por %p183, %p184
      %p186 = scmp.ne.s32.totalorder %s178, %s181
      %p187 = scmp.eq.s32.totalorder %s16, 0
      %p188 = por %p186, %p187
      %p189 = scmp.ne.s32.totalorder %s178, %s181
      %p190 = scmp.eq.s32.totalorder %s21, 1
      %p191 = por %p189, %p190
      %p192 = scmp.ne.s32.totalorder %s181, %s182
      %p193 = scmp.eq.s32.totalorder %s21, 0
      %p194 = por %p192, %p193
      %p195 = scmp.ne.s32.totalorder %s181, %s182
      %p196 = scmp.eq.s32.totalorder %s22, 1
      %p197 = por %p195, %p196
      %p199 = scmp.ne.s32.totalorder %s182, %s198
      %p200 = scmp.eq.s32.totalorder %s22, 0
      %p201 = por %p199, %p200
      %p202 = scmp.le.s32.totalorder 1, %s16
      %p203 = scmp.lt.s32.totalorder %s16, 3
      %p204 = pnand %p202, %p203
      %p205 = pneg %p204
      // Predicated region
      $region9: #{tpu_custom_call.1} parent=5 // pred_check
        _
      $region10: #{tpu_custom_call.1} parent=5 // pred_check_branch
        %207 = sbr.rel (%p204) target = $region12
      $region11: #{tpu_custom_call.1} parent=5 // pred_region
        %s208 = ssub.s32 %s16, 1
        // Predicated region
        $region13: #{tpu_custom_call.1} parent=11 // pred_check
          %p209 = pneg %p63
        $region14: #{tpu_custom_call.1} parent=11 // pred_check_branch
          %211 = sbr.rel (%p209) target = $region16
        $region15: #{tpu_custom_call.1} parent=11 // pred_region
          _
        $region16: #{tpu_custom_call.1} parent=11 // pred_fallthru
          _
        // Predicated region
        $region17: #{tpu_custom_call.1} parent=11 // pred_check
          %p212 = pneg %p84
        $region18: #{tpu_custom_call.1} parent=11 // pred_check_branch
          %214 = sbr.rel (%p212) target = $region20
        $region19: #{tpu_custom_call.1} parent=11 // pred_region
          _
        $region20: #{tpu_custom_call.1} parent=11 // pred_fallthru
          _
        // Predicated region
        $region21: #{tpu_custom_call.1} parent=11 // pred_check
          %p215 = pneg %p105
        $region22: #{tpu_custom_call.1} parent=11 // pred_check_branch
          %217 = sbr.rel (%p215) target = $region24
        $region23: #{tpu_custom_call.1} parent=11 // pred_region
          _
        $region24: #{tpu_custom_call.1} parent=11 // pred_fallthru
          _
        // Predicated region
        $region25: #{tpu_custom_call.1} parent=11 // pred_check
          %p218 = pneg %p126
        $region26: #{tpu_custom_call.1} parent=11 // pred_check_branch
          %220 = sbr.rel (%p218) target = $region28
        $region27: #{tpu_custom_call.1} parent=11 // pred_region
          _
        $region28: #{tpu_custom_call.1} parent=11 // pred_fallthru
          _
        // Predicated region
        $region29: #{tpu_custom_call.1} parent=11 // pred_check
          %p221 = pneg %p147
        $region30: #{tpu_custom_call.1} parent=11 // pred_check_branch
          %223 = sbr.rel (%p221) target = $region32
        $region31: #{tpu_custom_call.1} parent=11 // pred_region
          _
        $region32: #{tpu_custom_call.1} parent=11 // pred_fallthru
          _
        // Predicated region
        $region33: #{tpu_custom_call.1} parent=11 // pred_check
          %p224 = pneg %p168
        $region34: #{tpu_custom_call.1} parent=11 // pred_check_branch
          %226 = sbr.rel (%p224) target = $region36
        $region35: #{tpu_custom_call.1} parent=11 // pred_region
          _
        $region36: #{tpu_custom_call.1} parent=11 // pred_fallthru
          _
      $region12: #{tpu_custom_call.1} parent=5 // pred_fallthru
        _
      %p227 = scmp.lt.s32.totalorder %s16, 2
      // Predicated region
      $region37: #{tpu_custom_call.1} parent=5 // pred_check
        %p228 = pneg %p227
      $region38: #{tpu_custom_call.1} parent=5 // pred_check_branch
        %230 = sbr.rel (%p228) target = $region40
      $region39: #{tpu_custom_call.1} parent=5 // pred_region
        // Predicated region
        $region41: #{tpu_custom_call.1} parent=39 // pred_check
          %p231 = pneg %p36
        $region42: #{tpu_custom_call.1} parent=39 // pred_check_branch
          %233 = sbr.rel (%p231) target = $region44
        $region43: #{tpu_custom_call.1} parent=39 // pred_region
          %p234 = scmp.lt.s32.totalorder %s16, 1
          %s235 = scalar_select %p234, %s16, 1
          %s236 = smul.addr %s235, 8
          %s237 = scalar_lea.vmem %s0, %s236
        $region44: #{tpu_custom_call.1} parent=39 // pred_fallthru
          _
      $region40: #{tpu_custom_call.1} parent=5 // pred_fallthru
        _
      %p238 = scmp.le.s32.totalorder 1, %s16
      %p239 = scmp.lt.s32.totalorder %s16, 3
      %p240 = pnand %p238, %p239
      %p241 = pneg %p240
      // Predicated region
      $region45: #{tpu_custom_call.1} parent=5 // pred_check
        _
      $region46: #{tpu_custom_call.1} parent=5 // pred_check_branch
        %243 = sbr.rel (%p240) target = $region48
      $region47: #{tpu_custom_call.1} parent=5 // pred_region
        %s244 = ssub.s32 %s16, 1
        %p245 = scmp.lt.s32.totalorder %s21, 1
        %s246 = scalar_select %p245, %s21, 1
        %s247 = smul.addr %s246, 8
        %s248 = scalar_lea.vmem %s0, %s247
        %p249 = pneg %p42
        %p250 = pneg %p39
        %p251 = pneg %p63
        %p252 = pneg %p60
        %p253 = pneg %p84
        %p254 = pneg %p81
        %p255 = pneg %p105
        %p256 = pneg %p102
        %p257 = pneg %p126
        %p258 = pneg %p123
        %p259 = pneg %p147
        %p260 = pneg %p144
        %p261 = pneg %p168
        %p262 = pneg %p165
        %p263 = pneg %p194
        %p264 = pneg %p191
        %s265 = sand.u32 %s181, 1
        %s266 = scalar_lea.sflag [#allocation3], %s265
        %s267 = sand.u32 %s181, 1
        %s268 = smul.addr %s267, 8
        %s269 = scalar_lea.vmem [#allocation2], %s268
        %p270 = scmp.lt.s32.totalorder %s21, 1
        %s271 = scalar_select %p270, %s21, 1
        %s272 = smul.addr %s271, 8
        %s273 = scalar_lea.vmem %s0, %s272
        %v275 = vld [vmem:[%s1] sm:$0x1]
        %v276 = vld [vmem:[%s1 + $0x1] sm:$0x1]
        %v277 = vld [vmem:[%s1 + $0x2] sm:$0x1]
        %v278 = vld [vmem:[%s1 + $0x3] sm:$0x1]
        %v279 = vld [vmem:[%s1 + $0x4] sm:$0x1]
        %v280 = vld [vmem:[%s1 + $0x5] sm:$0x1]
        %v281 = vld [vmem:[%s1 + $0x6] sm:$0x1]
        %v282 = vld [vmem:[%s1 + $0x7] sm:$0x1]
        %v283 = vld [vmem:[%s273] sm:$0xff]
        %vm284 = vcmask 261120
        %v285 = vsel %vm284, %v283, 0.0
        %286 = vadd.xlane.f32.xlu0 %v285
        %v287 = vpop.xlane.xlu0 %286
        %v288 = vrcp.pop 32.0
        %v289 = vmul.f32 32.0, %v288
        %v290 = vsub.f32 1.0, %v289
        %v291 = vmul.f32 %v288, %v290
        %v292 = vadd.f32 %v288, %v291
        %vm293 = vweird.f32 %v288
        %v294 = vsel %vm293, %v288, %v292
        %v295 = vmul.f32 %v287, %v294
        %v296 = vsub.f32 %v283, %v295
        %v297 = vmul.f32 %v296, %v296
        %v298 = vsel %vm284, %v297, 0.0
        %299 = vadd.xlane.f32.xlu0 %v298
        %v300 = vpop.xlane.xlu0 %299
        %v301 = vmul.f32 %v300, %v294
        %v302 = vadd.f32 %v301, 1e-05
        %v303 = vrsqrt.pop %v302
        %v304 = vmul.f32 %v303, %v302
        %v305 = vmul.f32 %v304, %v303
        %v306 = vmul.f32 0.5, %v305
        %v307 = vsub.f32 1.5, %v306
        %v308 = vmul.f32 %v303, %v307
        %vm309 = vweird.f32 %v302
        %vm310 = vweird.f32 %v303
        %vm311 = vmor %vm309, %vm310
        %v312 = vsel %vm311, %v303, %v308
        %v313 = vmul.f32 %v296, %v312
        %v314 = vperm.slane %v275, 0
        %v315 = vmul.f32 %v313, %v314
        %v316 = vperm.slane %v276, 0
        %v317 = vadd.f32 %v315, %v316
        %v318 = vpack.c.bf16 %v317, %v317
        %v319 = vld [vmem:[%s3] sm:$0xf]
        %v320 = vld [vmem:[%s3 + $0x4] sm:$0xf]
        %v321 = vld [vmem:[%s3 + $0x8] sm:$0xf]
        %v322 = vld [vmem:[%s3 + $0xc] sm:$0xf]
        %v323 = vperm.slane %v279, 0
        %v328 = vunpack.c.l.b16 %v319
        %v329 = vunpack.c.l.b16 %v320
        %v330 = vunpack.c.l.b16 %v321
        %v331 = vunpack.c.l.b16 %v322
        %v332 = vpack.c.b16 %v329, %v328
        %v333 = vpack.c.b16 %v331, %v330
        %v337 = vsel %vm284, %v318, 0
        %339 = vmatpush.bf16.msra.mxu0 0
        %340 = vmatpush.bf16.msra.mxu0 0
        %341 = vmatpush.bf16.msra.mxu0 0
        %342 = vmatpush.bf16.msra.mxu0 0
        %343 = vmatpush.bf16.msra.mxu0 0
        %344 = vmatpush.bf16.msra.mxu0 0
        %345 = vmatpush.bf16.msra.mxu0 %v333
        %346 = vmatpush.bf16.msra.mxu0 %v332
        %347 = vmatmul.bf16.gmra.mxu0 %v337
        %v348 = vpop.f32.mrf.mxu0
        %v349 = vadd.f32 %v323, %v348
        %v350 = vpop.f32.mrf.mxu0
        %351 = vdwg.mxu0
        %v352 = vmul.f32 %v349, 0.17677669
        %v353 = vld [vmem:[%s2] sm:$0xff]
        %v354 = vpack.c.bf16 %v352, %v352
        %v355 = vpack.c.bf16 %v349, %v349
        %v357 = vunpack.c.l.b16 %v355
        %v358 = vpack.c.b16 %v357, %v357
        %359 = vrot.lane.b32.xlu0 %v358, 96
        %v360 = vpop.permute.xlu0 %359
        %vm361 = vcmask 64512
        %v363 = vsel %vm361, %v354, 0
        %v366 = vsel %vm361, %v360, 0
        %368 = vmatpush.bf16.xpose.msra.mxu0 0
        %369 = vmatpush.bf16.xpose.msra.mxu0 0
        %370 = vmatpush.bf16.xpose.msra.mxu0 0
        %371 = vmatpush.bf16.xpose.msra.mxu0 0
        %372 = vmatpush.bf16.xpose.msra.mxu0 0
        %373 = vmatpush.bf16.xpose.msra.mxu0 0
        %374 = vmatpush.bf16.xpose.msra.mxu0 0
        %375 = vmatpush.bf16.xpose.msra.mxu0 %v366
        %376 = vmatmul.bf16.gmra.mxu0 %v363
        %v377 = vpop.f32.mrf.mxu0
        %v378 = vadd.f32 %v353, %v377
        %v379 = vpop.f32.mrf.mxu0
        %380 = vdwg.mxu0
        %v381 = vsel %vm361, %v378, -inf
        %382 = vmax.xlane.f32.xlu0 %v381
        %v383 = vpop.xlane.xlu0 %382
        %v384 = vsub.f32 %v378, %v383
        %v385 = vmul.f32 %v384, 1.442695
        %v386 = vpow.pop %v385
        %v387 = vsel %vm361, %v386, 0.0
        %388 = vadd.xlane.f32.xlu0 %v387
        %v389 = vpop.xlane.xlu0 %388
        %v390 = vrcp.pop %v389
        %v391 = vmul.f32 %v389, %v390
        %v392 = vsub.f32 1.0, %v391
        %v393 = vmul.f32 %v390, %v392
        %v394 = vadd.f32 %v390, %v393
        %vm395 = vweird.f32 %v389
        %vm396 = vweird.f32 %v390
        %vm397 = vmor %vm395, %vm396
        %v398 = vsel %vm397, %v390, %v394
        %v399 = vand.u32 2147483647, %v389
        %vm400 = vcmp.eq.f32.partialorder %v399, 8.507059e+37
        %v401 = vand.u32 %v389, 2147483648
        %v402 = vor.u32 1.1754944e-38, %v401
        %v403 = vsel %vm400, %v402, %v398
        %v404 = vmul.f32 %v386, %v403
        %v405 = vpack.c.bf16 %v404, %v404
        %406 = vrot.lane.b32.xlu0 %v358, 64
        %v407 = vpop.permute.xlu0 %406
        %v409 = vsel %vm361, %v405, 0
        %vm411 = vcmask 1043456
        %v413 = vsel %vm411, %v407, 0
        %415 = vmatpush.bf16.msra.mxu0 0
        %416 = vmatpush.bf16.msra.mxu0 0
        %417 = vmatpush.bf16.msra.mxu0 0
        %418 = vmatpush.bf16.msra.mxu0 0
        %419 = vmatpush.bf16.msra.mxu0 0
        %420 = vmatpush.bf16.msra.mxu0 0
        %421 = vmatpush.bf16.msra.mxu0 0
        %422 = vmatpush.bf16.msra.mxu0 %v413
        %423 = vmatmul.bf16.gmra.mxu0 %v409
        %v424 = vpop.f32.mrf.mxu0
        %v425 = vadd.f32 0.0, %v424
        %v426 = vpop.f32.mrf.mxu0
        %427 = vdwg.mxu0
        %v429 = vunpack.c.l.b16 %v354
        %v430 = vpack.c.b16 %v429, %v429
        %431 = vrot.lane.b32.xlu0 %v430, 120
        %v432 = vpop.permute.xlu0 %431
        %433 = vrot.lane.b32.xlu0 %v358, 88
        %v434 = vpop.permute.xlu0 %433
        %v436 = vsel %vm361, %v432, 0
        %v439 = vsel %vm361, %v434, 0
        %441 = vmatpush.bf16.xpose.msra.mxu0 0
        %442 = vmatpush.bf16.xpose.msra.mxu0 0
        %443 = vmatpush.bf16.xpose.msra.mxu0 0
        %444 = vmatpush.bf16.xpose.msra.mxu0 0
        %445 = vmatpush.bf16.xpose.msra.mxu0 0
        %446 = vmatpush.bf16.xpose.msra.mxu0 0
        %447 = vmatpush.bf16.xpose.msra.mxu0 0
        %448 = vmatpush.bf16.xpose.msra.mxu0 %v439
        %449 = vmatmul.bf16.gmra.mxu0 %v436
        %v450 = vpop.f32.mrf.mxu0
        %v451 = vadd.f32 %v353, %v450
        %v452 = vpop.f32.mrf.mxu0
        %453 = vdwg.mxu0
        %v454 = vsel %vm361, %v451, -inf
        %455 = vmax.xlane.f32.xlu0 %v454
        %v456 = vpop.xlane.xlu0 %455
        %v457 = vsub.f32 %v451, %v456
        %v458 = vmul.f32 %v457, 1.442695
        %v459 = vpow.pop %v458
        %v460 = vsel %vm361, %v459, 0.0
        %461 = vadd.xlane.f32.xlu0 %v460
        %v462 = vpop.xlane.xlu0 %461
        %v463 = vrcp.pop %v462
        %v464 = vmul.f32 %v462, %v463
        %v465 = vsub.f32 1.0, %v464
        %v466 = vmul.f32 %v463, %v465
        %v467 = vadd.f32 %v463, %v466
        %vm468 = vweird.f32 %v462
        %vm469 = vweird.f32 %v463
        %vm470 = vmor %vm468, %vm469
        %v471 = vsel %vm470, %v463, %v467
        %v472 = vand.u32 2147483647, %v462
        %vm473 = vcmp.eq.f32.partialorder %v472, 8.507059e+37
        %v474 = vand.u32 %v462, 2147483648
        %v475 = vor.u32 1.1754944e-38, %v474
        %v476 = vsel %vm473, %v475, %v471
        %v477 = vmul.f32 %v459, %v476
        %v478 = vpack.c.bf16 %v477, %v477
        %479 = vrot.lane.b32.xlu0 %v358, 56
        %v480 = vpop.permute.xlu0 %479
        %v482 = vsel %vm361, %v478, 0
        %v485 = vsel %vm411, %v480, 0
        %487 = vmatpush.bf16.msra.mxu0 0
        %488 = vmatpush.bf16.msra.mxu0 0
        %489 = vmatpush.bf16.msra.mxu0 0
        %490 = vmatpush.bf16.msra.mxu0 0
        %491 = vmatpush.bf16.msra.mxu0 0
        %492 = vmatpush.bf16.msra.mxu0 0
        %493 = vmatpush.bf16.msra.mxu0 0
        %494 = vmatpush.bf16.msra.mxu0 %v485
        %495 = vmatmul.bf16.gmra.mxu0 %v482
        %v496 = vpop.f32.mrf.mxu0
        %v497 = vadd.f32 0.0, %v496
        %v498 = vpop.f32.mrf.mxu0
        %499 = vdwg.mxu0
        %500 = vrot.lane.b32.xlu0 %v430, 112
        %v501 = vpop.permute.xlu0 %500
        %502 = vrot.lane.b32.xlu0 %v358, 80
        %v503 = vpop.permute.xlu0 %502
        %v505 = vsel %vm361, %v501, 0
        %v508 = vsel %vm361, %v503, 0
        %510 = vmatpush.bf16.xpose.msra.mxu0 0
        %511 = vmatpush.bf16.xpose.msra.mxu0 0
        %512 = vmatpush.bf16.xpose.msra.mxu0 0
        %513 = vmatpush.bf16.xpose.msra.mxu0 0
        %514 = vmatpush.bf16.xpose.msra.mxu0 0
        %515 = vmatpush.bf16.xpose.msra.mxu0 0
        %516 = vmatpush.bf16.xpose.msra.mxu0 0
        %517 = vmatpush.bf16.xpose.msra.mxu0 %v508
        %518 = vmatmul.bf16.gmra.mxu0 %v505
        %v519 = vpop.f32.mrf.mxu0
        %v520 = vadd.f32 %v353, %v519
        %v521 = vpop.f32.mrf.mxu0
        %522 = vdwg.mxu0
        %v523 = vsel %vm361, %v520, -inf
        %524 = vmax.xlane.f32.xlu0 %v523
        %v525 = vpop.xlane.xlu0 %524
        %v526 = vsub.f32 %v520, %v525
        %v527 = vmul.f32 %v526, 1.442695
        %v528 = vpow.pop %v527
        %v529 = vsel %vm361, %v528, 0.0
        %530 = vadd.xlane.f32.xlu0 %v529
        %v531 = vpop.xlane.xlu0 %530
        %v532 = vrcp.pop %v531
        %v533 = vmul.f32 %v531, %v532
        %v534 = vsub.f32 1.0, %v533
        %v535 = vmul.f32 %v532, %v534
        %v536 = vadd.f32 %v532, %v535
        %vm537 = vweird.f32 %v531
        %vm538 = vweird.f32 %v532
        %vm539 = vmor %vm537, %vm538
        %v540 = vsel %vm539, %v532, %v536
        %v541 = vand.u32 2147483647, %v531
        %vm542 = vcmp.eq.f32.partialorder %v541, 8.507059e+37
        %v543 = vand.u32 %v531, 2147483648
        %v544 = vor.u32 1.1754944e-38, %v543
        %v545 = vsel %vm542, %v544, %v540
        %v546 = vmul.f32 %v528, %v545
        %v547 = vpack.c.bf16 %v546, %v546
        %548 = vrot.lane.b32.xlu0 %v358, 48
        %v549 = vpop.permute.xlu0 %548
        %v551 = vsel %vm361, %v547, 0
        %v554 = vsel %vm411, %v549, 0
        %556 = vmatpush.bf16.msra.mxu0 0
        %557 = vmatpush.bf16.msra.mxu0 0
        %558 = vmatpush.bf16.msra.mxu0 0
        %559 = vmatpush.bf16.msra.mxu0 0
        %560 = vmatpush.bf16.msra.mxu0 0
        %561 = vmatpush.bf16.msra.mxu0 0
        %562 = vmatpush.bf16.msra.mxu0 0
        %563 = vmatpush.bf16.msra.mxu0 %v554
        %564 = vmatmul.bf16.gmra.mxu0 %v551
        %v565 = vpop.f32.mrf.mxu0
        %v566 = vadd.f32 0.0, %v565
        %v567 = vpop.f32.mrf.mxu0
        %568 = vdwg.mxu0
        %569 = vrot.lane.b32.xlu0 %v430, 104
        %v570 = vpop.permute.xlu0 %569
        %571 = vrot.lane.b32.xlu0 %v358, 72
        %v572 = vpop.permute.xlu0 %571
        %v574 = vsel %vm361, %v570, 0
        %v577 = vsel %vm361, %v572, 0
        %579 = vmatpush.bf16.xpose.msra.mxu0 0
        %580 = vmatpush.bf16.xpose.msra.mxu0 0
        %581 = vmatpush.bf16.xpose.msra.mxu0 0
        %582 = vmatpush.bf16.xpose.msra.mxu0 0
        %583 = vmatpush.bf16.xpose.msra.mxu0 0
        %584 = vmatpush.bf16.xpose.msra.mxu0 0
        %585 = vmatpush.bf16.xpose.msra.mxu0 0
        %586 = vmatpush.bf16.xpose.msra.mxu0 %v577
        %587 = vmatmul.bf16.gmra.mxu0 %v574
        %v588 = vpop.f32.mrf.mxu0
        %v589 = vadd.f32 %v353, %v588
        %v590 = vpop.f32.mrf.mxu0
        %591 = vdwg.mxu0
        %v592 = vsel %vm361, %v589, -inf
        %593 = vmax.xlane.f32.xlu0 %v592
        %v594 = vpop.xlane.xlu0 %593
        %v595 = vsub.f32 %v589, %v594
        %v596 = vmul.f32 %v595, 1.442695
        %v597 = vpow.pop %v596
        %v598 = vsel %vm361, %v597, 0.0
        %599 = vadd.xlane.f32.xlu0 %v598
        %v600 = vpop.xlane.xlu0 %599
        %v601 = vrcp.pop %v600
        %v602 = vmul.f32 %v600, %v601
        %v603 = vsub.f32 1.0, %v602
        %v604 = vmul.f32 %v601, %v603
        %v605 = vadd.f32 %v601, %v604
        %vm606 = vweird.f32 %v600
        %vm607 = vweird.f32 %v601
        %vm608 = vmor %vm606, %vm607
        %v609 = vsel %vm608, %v601, %v605
        %v610 = vand.u32 2147483647, %v600
        %vm611 = vcmp.eq.f32.partialorder %v610, 8.507059e+37
        %v612 = vand.u32 %v600, 2147483648
        %v613 = vor.u32 1.1754944e-38, %v612
        %v614 = vsel %vm611, %v613, %v609
        %v615 = vmul.f32 %v597, %v614
        %v616 = vpack.c.bf16 %v615, %v615
        %617 = vrot.lane.b32.xlu0 %v358, 40
        %v618 = vpop.permute.xlu0 %617
        %v620 = vsel %vm361, %v616, 0
        %v623 = vsel %vm411, %v618, 0
        %625 = vmatpush.bf16.msra.mxu0 0
        %626 = vmatpush.bf16.msra.mxu0 0
        %627 = vmatpush.bf16.msra.mxu0 0
        %628 = vmatpush.bf16.msra.mxu0 0
        %629 = vmatpush.bf16.msra.mxu0 0
        %630 = vmatpush.bf16.msra.mxu0 0
        %631 = vmatpush.bf16.msra.mxu0 0
        %632 = vmatpush.bf16.msra.mxu0 %v623
        %633 = vmatmul.bf16.gmra.mxu0 %v620
        %v634 = vpop.f32.mrf.mxu0
        %v635 = vadd.f32 0.0, %v634
        %v636 = vpop.f32.mrf.mxu0
        %637 = vdwg.mxu0
        %639 = vrot.lane.b32.xlu0 %v497, 8
        %v640 = vpop.permute.xlu0 %639
        %643 = vrot.lane.b32.xlu0 %v566, 16
        %v644 = vpop.permute.xlu0 %643
        %647 = vrot.lane.b32.xlu0 %v635, 24
        %v648 = vpop.permute.xlu0 %647
        %v650 = vsel %vm361, %v425, %v640
        %vm651 = vcmask 130048
        %v652 = vsel %vm651, %v650, %v644
        %vm653 = vcmask 195584
        %v654 = vsel %vm653, %v652, %v648
        %v655 = vpack.c.bf16 %v654, %v654
        %v656 = vld [vmem:[%s4] sm:$0xf]
        %v657 = vld [vmem:[%s4 + $0x4] sm:$0xf]
        %v658 = vld [vmem:[%s4 + $0x8] sm:$0xf]
        %v659 = vld [vmem:[%s4 + $0xc] sm:$0xf]
        %v660 = vperm.slane %v280, 0
        %v665 = vunpack.c.l.b16 %v656
        %v666 = vunpack.c.l.b16 %v657
        %v667 = vunpack.c.l.b16 %v658
        %v668 = vunpack.c.l.b16 %v659
        %v669 = vpack.c.b16 %v666, %v665
        %v670 = vpack.c.b16 %v668, %v667
        %v674 = vsel %vm284, %v655, 0
        %676 = vmatpush.bf16.msra.mxu0 0
        %677 = vmatpush.bf16.msra.mxu0 0
        %678 = vmatpush.bf16.msra.mxu0 0
        %679 = vmatpush.bf16.msra.mxu0 0
        %680 = vmatpush.bf16.msra.mxu0 0
        %681 = vmatpush.bf16.msra.mxu0 0
        %682 = vmatpush.bf16.msra.mxu0 %v670
        %683 = vmatpush.bf16.msra.mxu0 %v669
        %684 = vmatmul.bf16.gmra.mxu0 %v674
        %v685 = vpop.f32.mrf.mxu0
        %v686 = vadd.f32 %v660, %v685
        %v687 = vpop.f32.mrf.mxu0
        %688 = vdwg.mxu0
        %v689 = vadd.f32 %v283, %v686
        %v690 = vsel %vm284, %v689, 0.0
        %691 = vadd.xlane.f32.xlu0 %v690
        %v692 = vpop.xlane.xlu0 %691
        %v693 = vmul.f32 %v692, %v294
        %v694 = vsub.f32 %v689, %v693
        %v695 = vmul.f32 %v694, %v694
        %v696 = vsel %vm284, %v695, 0.0
        %697 = vadd.xlane.f32.xlu0 %v696
        %v698 = vpop.xlane.xlu0 %697
        %v699 = vmul.f32 %v698, %v294
        %v700 = vadd.f32 %v699, 1e-05
        %v701 = vrsqrt.pop %v700
        %v702 = vmul.f32 %v701, %v700
        %v703 = vmul.f32 %v702, %v701
        %v704 = vmul.f32 0.5, %v703
        %v705 = vsub.f32 1.5, %v704
        %v706 = vmul.f32 %v701, %v705
        %vm707 = vweird.f32 %v700
        %vm708 = vweird.f32 %v701
        %vm709 = vmor %vm707, %vm708
        %v710 = vsel %vm709, %v701, %v706
        %v711 = vmul.f32 %v694, %v710
        %v712 = vperm.slane %v277, 0
        %v713 = vmul.f32 %v711, %v712
        %v714 = vperm.slane %v278, 0
        %v715 = vadd.f32 %v713, %v714
        %v716 = vpack.c.bf16 %v715, %v715
        %v717 = vld [vmem:[%s5] sm:$0xf]
        %v718 = vld [vmem:[%s5 + $0x4] sm:$0xf]
        %v719 = vld [vmem:[%s5 + $0x8] sm:$0xf]
        %v720 = vld [vmem:[%s5 + $0xc] sm:$0xf]
        %v721 = vperm.slane %v281, 0
        %v726 = vunpack.c.l.b16 %v717
        %v727 = vunpack.c.l.b16 %v718
        %v728 = vunpack.c.l.b16 %v719
        %v729 = vunpack.c.l.b16 %v720
        %v730 = vpack.c.b16 %v727, %v726
        %v731 = vpack.c.b16 %v729, %v728
        %v735 = vsel %vm284, %v716, 0
        %737 = vmatpush.bf16.msra.mxu0 0
        %738 = vmatpush.bf16.msra.mxu0 0
        %739 = vmatpush.bf16.msra.mxu0 0
        %740 = vmatpush.bf16.msra.mxu0 0
        %741 = vmatpush.bf16.msra.mxu0 0
        %742 = vmatpush.bf16.msra.mxu0 0
        %743 = vmatpush.bf16.msra.mxu0 %v731
        %744 = vmatpush.bf16.msra.mxu0 %v730
        %745 = vmatmul.bf16.gmra.mxu0 %v735
        %v746 = vpop.f32.mrf.mxu0
        %v747 = vadd.f32 %v721, %v746
        %v748 = vpop.f32.mrf.mxu0
        %749 = vdwg.mxu0
        %v750 = vmax.f32 %v747, 0.0
        %v751 = vpack.c.bf16 %v750, %v750
        %v752 = vld [vmem:[%s6] sm:$0xf]
        %v753 = vld [vmem:[%s6 + $0x4] sm:$0xf]
        %v754 = vld [vmem:[%s6 + $0x8] sm:$0xf]
        %v755 = vld [vmem:[%s6 + $0xc] sm:$0xf]
        %v756 = vld [vmem:[%s6 + $0x10] sm:$0xf]
        %v757 = vld [vmem:[%s6 + $0x14] sm:$0xf]
        %v758 = vld [vmem:[%s6 + $0x18] sm:$0xf]
        %v759 = vld [vmem:[%s6 + $0x1c] sm:$0xf]
        %v760 = vld [vmem:[%s6 + $0x20] sm:$0xf]
        %v761 = vld [vmem:[%s6 + $0x24] sm:$0xf]
        %v762 = vld [vmem:[%s6 + $0x28] sm:$0xf]
        %v763 = vld [vmem:[%s6 + $0x2c] sm:$0xf]
        %v764 = vld [vmem:[%s6 + $0x30] sm:$0xf]
        %v765 = vld [vmem:[%s6 + $0x34] sm:$0xf]
        %v766 = vld [vmem:[%s6 + $0x38] sm:$0xf]
        %v767 = vld [vmem:[%s6 + $0x3c] sm:$0xf]
        %v768 = vperm.slane %v282, 0
        %v785 = vunpack.c.l.b16 %v752
        %v786 = vunpack.c.l.b16 %v753
        %v787 = vunpack.c.l.b16 %v754
        %v788 = vunpack.c.l.b16 %v755
        %v789 = vunpack.c.l.b16 %v756
        %v790 = vunpack.c.l.b16 %v757
        %v791 = vunpack.c.l.b16 %v758
        %v792 = vunpack.c.l.b16 %v759
        %v793 = vunpack.c.l.b16 %v760
        %v794 = vunpack.c.l.b16 %v761
        %v795 = vunpack.c.l.b16 %v762
        %v796 = vunpack.c.l.b16 %v763
        %v797 = vunpack.c.l.b16 %v764
        %v798 = vunpack.c.l.b16 %v765
        %v799 = vunpack.c.l.b16 %v766
        %v800 = vunpack.c.l.b16 %v767
        %v801 = vpack.c.b16 %v786, %v785
        %v802 = vpack.c.b16 %v788, %v787
        %v803 = vpack.c.b16 %v790, %v789
        %v804 = vpack.c.b16 %v792, %v791
        %v805 = vpack.c.b16 %v794, %v793
        %v806 = vpack.c.b16 %v796, %v795
        %v807 = vpack.c.b16 %v798, %v797
        %v808 = vpack.c.b16 %v800, %v799
        %817 = vmatpush.bf16.msra.mxu0 %v808
        %818 = vmatpush.bf16.msra.mxu0 %v807
        %819 = vmatpush.bf16.msra.mxu0 %v806
        %820 = vmatpush.bf16.msra.mxu0 %v805
        %821 = vmatpush.bf16.msra.mxu0 %v804
        %822 = vmatpush.bf16.msra.mxu0 %v803
        %823 = vmatpush.bf16.msra.mxu0 %v802
        %824 = vmatpush.bf16.msra.mxu0 %v801
        %825 = vmatmul.bf16.gmra.mxu0 %v751
        %v826 = vpop.f32.mrf.mxu0
        %v827 = vadd.f32 %v768, %v826
        %v828 = vpop.f32.mrf.mxu0
        %829 = vdwg.mxu0
        %v830 = vadd.f32 %v689, %v827
        %831 = vst.msk [vmem:[%s269] sm:$0xff] %vm284, %v830
        %s832 = sand.u32 %s181, 1
        %s833 = scalar_lea.sflag [#allocation3], %s832
        %s834 = sand.u32 %s181, 1
        %s835 = smul.addr %s834, 8
        %s836 = scalar_lea.vmem [#allocation2], %s835
        // Predicated region
        $region49: #{tpu_custom_call.1} parent=47 // pred_check
          %p837 = pneg %p191
        $region50: #{tpu_custom_call.1} parent=47 // pred_check_branch
          %839 = sbr.rel (%p837) target = $region52
        $region51: #{tpu_custom_call.1} parent=47 // pred_region
          %841 = vsyncadd %s833, 0
          %s842 = smul.addr %s21, 8
          %s843 = scalar_lea.hbm %s7, %s842
          %s845 = sshll.u32 %s836, 4
          %s846 = int_to_ptr.vmem [resolvable:$true] %s845
          %s847 = sshll.u32 %s843, 4
          %s848 = int_to_ptr.hbm [resolvable:$true] %s847
          %850 = dma.vmem_to_hbm [thread:$0]  %s846, 128, %s848, %s833
        $region52: #{tpu_custom_call.1} parent=47 // pred_fallthru
          _
      $region48: #{tpu_custom_call.1} parent=5 // pred_fallthru
        _
      %p851 = scmp.le.s32.totalorder 2, %s16
      // Predicated region
      $region53: #{tpu_custom_call.1} parent=5 // pred_check
        %p852 = pneg %p851
      $region54: #{tpu_custom_call.1} parent=5 // pred_check_branch
        %854 = sbr.rel (%p852) target = $region56
      $region55: #{tpu_custom_call.1} parent=5 // pred_region
        %s855 = ssub.s32 %s16, 2
        // Predicated region
        $region57: #{tpu_custom_call.1} parent=55 // pred_check
          %p856 = pneg %p197
        $region58: #{tpu_custom_call.1} parent=55 // pred_check_branch
          %858 = sbr.rel (%p856) target = $region60
        $region59: #{tpu_custom_call.1} parent=55 // pred_region
          %s859 = sand.u32 %s182, 1
          %s860 = scalar_lea.sflag [#allocation3], %s859
          %s861 = sand.u32 %s182, 1
          %s862 = smul.addr %s861, 8
          %s863 = scalar_lea.vmem [#allocation2], %s862
          %865 = dma.done %s860, 128
        $region60: #{tpu_custom_call.1} parent=55 // pred_fallthru
          _
      $region56: #{tpu_custom_call.1} parent=5 // pred_fallthru
        _
    $region6: #{tpu_custom_call.1} parent=1 // loop_footer
      %s20 = sadd.s32 1, %s16
    $region7: #{tpu_custom_call.1} parent=1 // loop_footer_branch
      %15 = sbr.rel target = $region3
    $region8: #{tpu_custom_call.1} parent=1 // loop_exit
      _
    %866 = vsyncpa [#allocation3], 1
    %s867 = scalar_lea.sflag [#allocation3], 1
    %868 = vsyncpa %s867, 1

</llo_original>
